<compile_context>
chip_gen: v6e
topology: v6e:2x2x1
jax: 0.10.0
libtpu: 0.0.40
codegen_flags: <defaults>
</compile_context>

<pallas_src>
import jax
import jax.numpy as jnp
from jax.experimental import pallas as pl
from jax.experimental.pallas import tpu as pltpu

_LANE = 128
_SUBLANE = 8


def _round_up(a: int, m: int) -> int:
    return ((a + m - 1) // m) * m


def _vmem_budget_bytes() -> int:
    """~80% of physical VMEM: v7x 64 MiB -> ~51 MiB, v5e/v6e 128 MiB -> ~102 MiB."""
    try:
        cap = int(pltpu.get_tpu_info().vmem_capacity_bytes)
    except Exception:
        cap = 64 * 1024 * 1024  # conservative fallback (v7x per-TensorCore VMEM)
    return int(cap * 0.8)


def _vmem_needed_bytes(tile_b, E, tn, nf, x_item, w_item, w_bufs):
    """Working-set estimate, incl. f32 accumulators and the bf16 cast of x."""
    return (2 * tile_b * E * x_item                        # x tiles (double-buffered)
            + (2 * tile_b * tn * x_item if nf > 1 else 0)  # x column tiles
            + 2 * tile_b * tn * x_item                     # out tiles (double-buffered)
            + 2 * E * tn * w_item * w_bufs                 # Wp^T / Wg^T blocks
            + 2 * tn * 4 * w_bufs                          # biases
            + 4 * tile_b * tn * 4                          # f32 matmul accs + temporaries
            + tile_b * E * 2)                              # bf16 cast of the x tile


def _choose_tiling(B, E, x_item, w_item, vmem_budget, batch_tile, feat_tile):
    # Feature (output-column) tile: only split when resident weights get large.
    if feat_tile is not None:
        tn = E if feat_tile >= E else max(_LANE, (int(feat_tile) // _LANE) * _LANE)
    else:
        tn = E
        if 2 * E * E * w_item > 0.4 * vmem_budget:
            cols = int((0.4 * vmem_budget) // (2 * E * w_item * 2))  # double-buffered
            tn = min(E, max(_LANE, (cols // _LANE) * _LANE))
    nf = pl.cdiv(E, tn)

    # Batch tile: ~4 MiB x tiles amortize the ~0.35 us per-grid-step overhead.
    if batch_tile is not None:
        tile_b = int(batch_tile)
    else:
        tile_b = max(256, (4 * 1024 * 1024) // max(1, E * x_item))
    if tile_b >= B:
        # >= 2 batch steps (when B allows) so both v7x TensorCores get work.
        tile_b = (B + 1) // 2 if B >= 16 else B
    if tile_b != B:
        tile_b = max(_SUBLANE, _round_up(tile_b, _SUBLANE))

    # Shrink the batch tile until the working set fits the VMEM budget.
    w_bufs = 1 if nf == 1 else 2
    while (tile_b > _SUBLANE and
           _vmem_needed_bytes(tile_b, E, tn, nf, x_item, w_item, w_bufs) > vmem_budget):
        tile_b = max(_SUBLANE, _round_up(tile_b // 2, _SUBLANE))
    return tile_b, tn, nf


def _highway_body(x_ref, xcol_ref, wp_ref, wg_ref, bp_ref, bg_ref, o_ref):
    # x_ref:    (tile_b, E)  activations (original dtype)
    # xcol_ref: (tile_b, tn) matching x columns for the combine (== x_ref if nf == 1)
    # wp_ref:   (E, tn)      Wp^T block (matmul dtype, usually bf16)
    # wg_ref:   (E, tn)      Wg^T block
    # bp_ref:   (1, tn)      f32 bias blocks
    # o_ref:    (tile_b, tn) output block
    x = x_ref[...]
    xm = x.astype(wp_ref.dtype)                     # bf16 feeds the MXU (no-op if already)

    proj = jnp.dot(xm, wp_ref[...], preferred_element_type=jnp.float32) + bp_ref[...]
    proj = jnp.maximum(proj, 0.0)                   # relu (f32)

    z = jnp.dot(xm, wg_ref[...], preferred_element_type=jnp.float32) + bg_ref[...]
    # sigmoid(z) = 1 / (1 + exp(-z)): exp + approx reciprocal both on the EUP.
    gate = pl.reciprocal(1.0 + jnp.exp(-z), approx=True)

    xcol = x if xcol_ref is x_ref else xcol_ref[...]
    xf = xcol.astype(jnp.float32)
    # gate*proj + (1-gate)*x  ==  x + gate*(proj - x)  (one fewer VPU multiply)
    o_ref[...] = (xf + gate * (proj - xf)).astype(o_ref.dtype)


def _highway_kernel(x_ref, wp_ref, wg_ref, bp_ref, bg_ref, o_ref):
    _highway_body(x_ref, x_ref, wp_ref, wg_ref, bp_ref, bg_ref, o_ref)


def _highway_kernel_feat_tiled(x_ref, xcol_ref, wp_ref, wg_ref, bp_ref, bg_ref, o_ref):
    _highway_body(x_ref, xcol_ref, wp_ref, wg_ref, bp_ref, bg_ref, o_ref)


def prepare_highway_params(w_proj, b_proj, w_gate, b_gate, *, matmul_dtype=jnp.bfloat16):
    """One-time parameter prep (hoisted out of the per-call path).

    nn.Linear computes x @ W^T + b, so weights are stored transposed (in, out)
    and cast to the MXU-native matmul dtype (bf16 by default); biases stay f32.
    """
    wp_t = jnp.asarray(w_proj).T.astype(matmul_dtype)
    wg_t = jnp.asarray(w_gate).T.astype(matmul_dtype)
    bp = jnp.asarray(b_proj).astype(jnp.float32).reshape(1, -1)
    bg = jnp.asarray(b_gate).astype(jnp.float32).reshape(1, -1)
    return wp_t, wg_t, bp, bg


def highway_forward(x, params, *, batch_tile=None, feat_tile=None):
    """Highway forward.  x: (..., E); returns same shape and dtype as x."""
    wp_t, wg_t, bp, bg = params
    orig_shape = x.shape
    E = orig_shape[-1]
    assert wp_t.shape == (E, E) and wg_t.shape == (E, E)
    x2d = x.reshape(-1, E)
    B = x2d.shape[0]

    x_item = jnp.dtype(x2d.dtype).itemsize
    w_item = jnp.dtype(wp_t.dtype).itemsize
    vmem_budget = _vmem_budget_bytes()
    tile_b, tn, nf = _choose_tiling(B, E, x_item, w_item, vmem_budget,
                                    batch_tile, feat_tile)
    nb = pl.cdiv(B, tile_b)
    feature_tiled = nf > 1

    cost = pl.CostEstimate(
        flops=4 * B * E * E + 8 * B * E,
        transcendentals=B * E,
        bytes_accessed=((2 + (1 if feature_tiled else 0)) * B * E * x_item
                        + 2 * E * E * w_item * (nb if feature_tiled else 1)
                        + 2 * E * 4))

    def run(single_buffer_weights):
        w_bufs = 1 if single_buffer_weights else 2
        vmem_needed = _vmem_needed_bytes(tile_b, E, tn, nf, x_item, w_item, w_bufs)
        # Always set the limit explicitly (v5e default is 16 MiB); never below
        # the 32 MiB v6e/v7x default, never above the per-generation budget.
        vmem_limit = int(min(vmem_budget,
                             max(vmem_needed + (4 << 20), 32 * 1024 * 1024)))
        wkw = {"pipeline_mode": pl.Buffered(1)} if single_buffer_weights else {}

        x_spec = pl.BlockSpec((tile_b, E), lambda i, j: (i, 0))       # resident across j
        wp_spec = pl.BlockSpec((E, tn), lambda i, j: (0, j), **wkw)
        wg_spec = pl.BlockSpec((E, tn), lambda i, j: (0, j), **wkw)
        bp_spec = pl.BlockSpec((1, tn), lambda i, j: (0, j), **wkw)
        bg_spec = pl.BlockSpec((1, tn), lambda i, j: (0, j), **wkw)
        out_spec = pl.BlockSpec((tile_b, tn), lambda i, j: (i, j))

        if feature_tiled:
            xcol_spec = pl.BlockSpec((tile_b, tn), lambda i, j: (i, j))
            in_specs = [x_spec, xcol_spec, wp_spec, wg_spec, bp_spec, bg_spec]
            args = (x2d, x2d, wp_t, wg_t, bp, bg)
            kernel = _highway_kernel_feat_tiled
        else:
            in_specs = [x_spec, wp_spec, wg_spec, bp_spec, bg_spec]
            args = (x2d, wp_t, wg_t, bp, bg)
            kernel = _highway_kernel

        return pl.pallas_call(
            kernel,
            out_shape=jax.ShapeDtypeStruct((B, E), x2d.dtype),
            grid_spec=pltpu.PrefetchScalarGridSpec(
                num_scalar_prefetch=0,
                grid=(nb, nf),
                in_specs=in_specs,
                out_specs=out_spec),
            compiler_params=pltpu.CompilerParams(
                dimension_semantics=("parallel", "parallel"),
                vmem_limit_bytes=vmem_limit),
            cost_estimate=cost,
        )(*args)

    if not feature_tiled:
        # Weight/bias block indices are grid-invariant here -> single-buffer them.
        try:
            out2d = run(single_buffer_weights=True)
        except Exception:
            # pl.Buffered(1) unsupported on this JAX build: default double-buffering.
            out2d = run(single_buffer_weights=False)
    else:
        out2d = run(single_buffer_weights=False)

    return out2d.reshape(orig_shape)


if __name__ == "__main__":
    def make_case(key, B, E):
        kx, kwp, kbp, kwg, kbg = jax.random.split(key, 5)
        bound = 1.0 / (E ** 0.5)   # nn.Linear default init range
        x = jax.random.normal(kx, (B, E), jnp.float32)
        w_proj = jax.random.uniform(kwp, (E, E), jnp.float32, -bound, bound)
        b_proj = jax.random.uniform(kbp, (E,), jnp.float32, -bound, bound)
        w_gate = jax.random.uniform(kwg, (E, E), jnp.float32, -bound, bound)
        b_gate = jax.random.uniform(kbg, (E,), jnp.float32, -bound, bound)
        return x, w_proj, b_proj, w_gate, b_gate

    def reference(x, w_proj, b_proj, w_gate, b_gate):
        proj = jax.nn.relu(x @ w_proj.T + b_proj)
        gate = jax.nn.sigmoid(x @ w_gate.T + b_gate)
        return gate * proj + (1.0 - gate) * x

    k1, k2 = jax.random.split(jax.random.PRNGKey(0))

    # Case 1: small shapes matching the module (batch of 8 "words", eword_size=64).
    x, wp, bp_, wg, bg_ = make_case(k1, 8, 64)
    params = prepare_highway_params(wp, bp_, wg, bg_)
    out = jax.block_until_ready(highway_forward(x, params))
    ref = reference(x, wp, bp_, wg, bg_)
    assert out.shape == ref.shape and out.dtype == ref.dtype
    assert jnp.allclose(out, ref, atol=3e-2, rtol=3e-2), "case 1 mismatch vs reference"

    # Case 2: exercises the ragged batch tail and the feature-tiled (2-D grid) path.
    x2, wp2, bp2, wg2, bg2 = make_case(k2, 37, 256)
    params2 = prepare_highway_params(wp2, bp2, wg2, bg2)
    out2 = jax.block_until_ready(
        highway_forward(x2, params2, batch_tile=16, feat_tile=128))
    ref2 = reference(x2, wp2, bp2, wg2, bg2)
    assert out2.shape == ref2.shape
    assert jnp.allclose(out2, ref2, atol=5e-2, rtol=5e-2), "case 2 mismatch vs reference"

    print("KERNEL_OK")
</pallas_src>

<mosaic_0001>
module attributes {stable_mosaic.version = 11 : i64} {
  func.func @_highway_kernel(%arg0: i32, %arg1: i32, %arg2: memref<8x64xf32, #tpu.memory_space<vmem>>, %arg3: memref<64x64xbf16, #tpu.memory_space<vmem>>, %arg4: memref<64x64xbf16, #tpu.memory_space<vmem>>, %arg5: memref<1x64xf32, #tpu.memory_space<vmem>>, %arg6: memref<1x64xf32, #tpu.memory_space<vmem>>, %arg7: memref<8x64xf32, #tpu.memory_space<vmem>>) attributes {dimension_semantics = [#tpu.dimension_semantics<parallel>, #tpu.dimension_semantics<parallel>], iteration_bounds = array<i64: 1, 1>, scalar_prefetch = 0 : i64, scratch_operands = 0 : i64, tpu.core_type = #tpu.core_type<tc>, window_params = [{transform_indices = @transform_0, window_bounds = array<i64: 8, 64>}, {pipeline_mode = #tpu.pipeline_mode<synchronous>, transform_indices = @transform_1, window_bounds = array<i64: 64, 64>}, {pipeline_mode = #tpu.pipeline_mode<synchronous>, transform_indices = @transform_2, window_bounds = array<i64: 64, 64>}, {pipeline_mode = #tpu.pipeline_mode<synchronous>, transform_indices = @transform_3, window_bounds = array<i64: 1, 64>}, {pipeline_mode = #tpu.pipeline_mode<synchronous>, transform_indices = @transform_4, window_bounds = array<i64: 1, 64>}, {transform_indices = @transform_5, window_bounds = array<i64: 8, 64>}]} {
    %c0 = arith.constant 0 : index
    %c0_0 = arith.constant 0 : index
    %0 = vector.load %arg2[%c0, %c0_0] : memref<8x64xf32, #tpu.memory_space<vmem>>, vector<8x64xf32>
    %1 = arith.truncf %0 : vector<8x64xf32> to vector<8x64xbf16>
    %c0_1 = arith.constant 0 : index
    %c0_2 = arith.constant 0 : index
    %2 = vector.load %arg3[%c0_1, %c0_2] : memref<64x64xbf16, #tpu.memory_space<vmem>>, vector<64x64xbf16>
    %cst = arith.constant dense<0.000000e+00> : vector<8x64xf32>
    %3 = tpu.matmul %1, %2, %cst {dimension_numbers = #tpu.dot_dimension_numbers<[1], [0], [0], [1], [0, 0, 1, 1], [], []>} : vector<8x64xbf16>, vector<64x64xbf16>, vector<8x64xf32> -> vector<8x64xf32>
    %c0_3 = arith.constant 0 : index
    %c0_4 = arith.constant 0 : index
    %4 = vector.load %arg5[%c0_3, %c0_4] : memref<1x64xf32, #tpu.memory_space<vmem>>, vector<1x64xf32>
    %5 = vector.broadcast %4 : vector<1x64xf32> to vector<8x64xf32>
    %6 = arith.addf %3, %5 : vector<8x64xf32>
    %cst_5 = arith.constant 0.000000e+00 : f32
    %7 = vector.broadcast %cst_5 : f32 to vector<8x64xf32>
    %8 = arith.maximumf %6, %7 : vector<8x64xf32>
    %c0_6 = arith.constant 0 : index
    %c0_7 = arith.constant 0 : index
    %9 = vector.load %arg4[%c0_6, %c0_7] : memref<64x64xbf16, #tpu.memory_space<vmem>>, vector<64x64xbf16>
    %cst_8 = arith.constant dense<0.000000e+00> : vector<8x64xf32>
    %10 = tpu.matmul %1, %9, %cst_8 {dimension_numbers = #tpu.dot_dimension_numbers<[1], [0], [0], [1], [0, 0, 1, 1], [], []>} : vector<8x64xbf16>, vector<64x64xbf16>, vector<8x64xf32> -> vector<8x64xf32>
    %c0_9 = arith.constant 0 : index
    %c0_10 = arith.constant 0 : index
    %11 = vector.load %arg6[%c0_9, %c0_10] : memref<1x64xf32, #tpu.memory_space<vmem>>, vector<1x64xf32>
    %12 = vector.broadcast %11 : vector<1x64xf32> to vector<8x64xf32>
    %13 = arith.addf %10, %12 : vector<8x64xf32>
    %cst_11 = arith.constant 0.000000e+00 : f32
    %14 = vector.broadcast %cst_11 : f32 to vector<8x64xf32>
    %15 = arith.subf %14, %13 : vector<8x64xf32>
    %16 = math.exp %15 : vector<8x64xf32>
    %cst_12 = arith.constant 1.000000e+00 : f32
    %17 = vector.broadcast %cst_12 : f32 to vector<8x64xf32>
    %18 = arith.addf %17, %16 : vector<8x64xf32>
    %19 = tpu.reciprocal %18 {approx = true} : vector<8x64xf32> -> vector<8x64xf32>
    %20 = arith.subf %8, %0 : vector<8x64xf32>
    %21 = arith.mulf %19, %20 : vector<8x64xf32>
    %22 = arith.addf %0, %21 : vector<8x64xf32>
    %c0_13 = arith.constant 0 : index
    %c0_14 = arith.constant 0 : index
    %23 = vector.load %arg7[%c0_13, %c0_14] : memref<8x64xf32, #tpu.memory_space<vmem>>, vector<8x64xf32>
    tpu.vector_store %arg7[%c0_13, %c0_14], %22 {strides = array<i32>} : memref<8x64xf32, #tpu.memory_space<vmem>>, vector<8x64xf32>,
    return
  }
  func.func @transform_0(%arg0: i32, %arg1: i32) -> (i32, i32) {
    %c0_i32 = arith.constant 0 : i32
    %c0_i32_0 = arith.constant 0 : i32
    return %arg0, %c0_i32 : i32, i32
  }
  func.func @transform_1(%arg0: i32, %arg1: i32) -> (i32, i32) {
    %c0_i32 = arith.constant 0 : i32
    %c0_i32_0 = arith.constant 0 : i32
    return %c0_i32, %arg1 : i32, i32
  }
  func.func @transform_2(%arg0: i32, %arg1: i32) -> (i32, i32) {
    %c0_i32 = arith.constant 0 : i32
    %c0_i32_0 = arith.constant 0 : i32
    return %c0_i32, %arg1 : i32, i32
  }
  func.func @transform_3(%arg0: i32, %arg1: i32) -> (i32, i32) {
    %c0_i32 = arith.constant 0 : i32
    %c0_i32_0 = arith.constant 0 : i32
    return %c0_i32, %arg1 : i32, i32
  }
  func.func @transform_4(%arg0: i32, %arg1: i32) -> (i32, i32) {
    %c0_i32 = arith.constant 0 : i32
    %c0_i32_0 = arith.constant 0 : i32
    return %c0_i32, %arg1 : i32, i32
  }
  func.func @transform_5(%arg0: i32, %arg1: i32) -> (i32, i32) {
    %c0_i32 = arith.constant 0 : i32
    return %arg0, %arg1 : i32, i32
  }
}

module attributes {stable_mosaic.version = 11 : i64} {
  func.func @_highway_kernel(%arg0: i32, %arg1: i32, %arg2: memref<8x64xf32, #tpu.memory_space<vmem>>, %arg3: memref<64x64xbf16, #tpu.memory_space<vmem>>, %arg4: memref<64x64xbf16, #tpu.memory_space<vmem>>, %arg5: memref<1x64xf32, #tpu.memory_space<vmem>>, %arg6: memref<1x64xf32, #tpu.memory_space<vmem>>, %arg7: memref<8x64xf32, #tpu.memory_space<vmem>>) attributes {dimension_semantics = [#tpu.dimension_semantics<parallel>, #tpu.dimension_semantics<parallel>], iteration_bounds = array<i64: 1, 1>, scalar_prefetch = 0 : i64, scratch_operands = 0 : i64, tpu.core_type = #tpu.core_type<tc>, window_params = [{transform_indices = @transform_0, window_bounds = array<i64: 8, 64>}, {transform_indices = @transform_1, window_bounds = array<i64: 64, 64>}, {transform_indices = @transform_2, window_bounds = array<i64: 64, 64>}, {transform_indices = @transform_3, window_bounds = array<i64: 1, 64>}, {transform_indices = @transform_4, window_bounds = array<i64: 1, 64>}, {transform_indices = @transform_5, window_bounds = array<i64: 8, 64>}]} {
    %c0 = arith.constant 0 : index
    %c0_0 = arith.constant 0 : index
    %0 = vector.load %arg2[%c0, %c0_0] : memref<8x64xf32, #tpu.memory_space<vmem>>, vector<8x64xf32>
    %1 = arith.truncf %0 : vector<8x64xf32> to vector<8x64xbf16>
    %c0_1 = arith.constant 0 : index
    %c0_2 = arith.constant 0 : index
    %2 = vector.load %arg3[%c0_1, %c0_2] : memref<64x64xbf16, #tpu.memory_space<vmem>>, vector<64x64xbf16>
    %cst = arith.constant dense<0.000000e+00> : vector<8x64xf32>
    %3 = tpu.matmul %1, %2, %cst {dimension_numbers = #tpu.dot_dimension_numbers<[1], [0], [0], [1], [0, 0, 1, 1], [], []>} : vector<8x64xbf16>, vector<64x64xbf16>, vector<8x64xf32> -> vector<8x64xf32>
    %c0_3 = arith.constant 0 : index
    %c0_4 = arith.constant 0 : index
    %4 = vector.load %arg5[%c0_3, %c0_4] : memref<1x64xf32, #tpu.memory_space<vmem>>, vector<1x64xf32>
    %5 = vector.broadcast %4 : vector<1x64xf32> to vector<8x64xf32>
    %6 = arith.addf %3, %5 : vector<8x64xf32>
    %cst_5 = arith.constant 0.000000e+00 : f32
    %7 = vector.broadcast %cst_5 : f32 to vector<8x64xf32>
    %8 = arith.maximumf %6, %7 : vector<8x64xf32>
    %c0_6 = arith.constant 0 : index
    %c0_7 = arith.constant 0 : index
    %9 = vector.load %arg4[%c0_6, %c0_7] : memref<64x64xbf16, #tpu.memory_space<vmem>>, vector<64x64xbf16>
    %cst_8 = arith.constant dense<0.000000e+00> : vector<8x64xf32>
    %10 = tpu.matmul %1, %9, %cst_8 {dimension_numbers = #tpu.dot_dimension_numbers<[1], [0], [0], [1], [0, 0, 1, 1], [], []>} : vector<8x64xbf16>, vector<64x64xbf16>, vector<8x64xf32> -> vector<8x64xf32>
    %c0_9 = arith.constant 0 : index
    %c0_10 = arith.constant 0 : index
    %11 = vector.load %arg6[%c0_9, %c0_10] : memref<1x64xf32, #tpu.memory_space<vmem>>, vector<1x64xf32>
    %12 = vector.broadcast %11 : vector<1x64xf32> to vector<8x64xf32>
    %13 = arith.addf %10, %12 : vector<8x64xf32>
    %cst_11 = arith.constant 0.000000e+00 : f32
    %14 = vector.broadcast %cst_11 : f32 to vector<8x64xf32>
    %15 = arith.subf %14, %13 : vector<8x64xf32>
    %16 = math.exp %15 : vector<8x64xf32>
    %cst_12 = arith.constant 1.000000e+00 : f32
    %17 = vector.broadcast %cst_12 : f32 to vector<8x64xf32>
    %18 = arith.addf %17, %16 : vector<8x64xf32>
    %19 = tpu.reciprocal %18 {approx = true} : vector<8x64xf32> -> vector<8x64xf32>
    %20 = arith.subf %8, %0 : vector<8x64xf32>
    %21 = arith.mulf %19, %20 : vector<8x64xf32>
    %22 = arith.addf %0, %21 : vector<8x64xf32>
    %c0_13 = arith.constant 0 : index
    %c0_14 = arith.constant 0 : index
    %23 = vector.load %arg7[%c0_13, %c0_14] : memref<8x64xf32, #tpu.memory_space<vmem>>, vector<8x64xf32>
    tpu.vector_store %arg7[%c0_13, %c0_14], %22 {strides = array<i32>} : memref<8x64xf32, #tpu.memory_space<vmem>>, vector<8x64xf32>,
    return
  }
  func.func @transform_0(%arg0: i32, %arg1: i32) -> (i32, i32) {
    %c0_i32 = arith.constant 0 : i32
    %c0_i32_0 = arith.constant 0 : i32
    return %arg0, %c0_i32 : i32, i32
  }
  func.func @transform_1(%arg0: i32, %arg1: i32) -> (i32, i32) {
    %c0_i32 = arith.constant 0 : i32
    %c0_i32_0 = arith.constant 0 : i32
    return %c0_i32, %arg1 : i32, i32
  }
  func.func @transform_2(%arg0: i32, %arg1: i32) -> (i32, i32) {
    %c0_i32 = arith.constant 0 : i32
    %c0_i32_0 = arith.constant 0 : i32
    return %c0_i32, %arg1 : i32, i32
  }
  func.func @transform_3(%arg0: i32, %arg1: i32) -> (i32, i32) {
    %c0_i32 = arith.constant 0 : i32
    %c0_i32_0 = arith.constant 0 : i32
    return %c0_i32, %arg1 : i32, i32
  }
  func.func @transform_4(%arg0: i32, %arg1: i32) -> (i32, i32) {
    %c0_i32 = arith.constant 0 : i32
    %c0_i32_0 = arith.constant 0 : i32
    return %c0_i32, %arg1 : i32, i32
  }
  func.func @transform_5(%arg0: i32, %arg1: i32) -> (i32, i32) {
    %c0_i32 = arith.constant 0 : i32
    return %arg0, %arg1 : i32, i32
  }
}

</mosaic_0001>

<llo_original>
// kernel: tpu_custom_call.1
$region0: #{tpu_custom_call.1}
  #allocation0 [shape = 'u32[]', space=smem, size = 0x4, offset = 0x4, fixed_abs, tag = 'smem constant byte address 0x4 - core index']
  #allocation1 [shape = 'u32[144,128]{1,0:T(1,128)}', space=vmem, size = 0x12000, scoped, tag = 'internal scratch']
  %s0 = inlined_call_operand.hbm [shape: f32[8,64], index: 0, kind: input, shape index: {}]
  %s1 = inlined_call_operand.hbm [shape: bf16[64,64], index: 1, kind: input, shape index: {}]
  %s2 = inlined_call_operand.hbm [shape: bf16[64,64], index: 2, kind: input, shape index: {}]
  %s3 = inlined_call_operand.vmem [shape: f32[1,64], index: 3, kind: input, shape index: {}]
  %s4 = inlined_call_operand.vmem [shape: f32[1,64], index: 4, kind: input, shape index: {}]
  %s5 = inlined_call_operand.hbm [shape: f32[8,64], index: 5, kind: output, shape index: {}]
  %s6 = sld [smem:[#allocation0]]
  $region42: #{tpu_custom_call.1} parent=0
    _
  %s8 = ssub.s32 1, %s6
  %s9 = scalar_select 0, %s8, %s6
  $region1: #{tpu_custom_call.1} parent=0
    #allocation2 [shape = 'u8[4096]{0}', space=vmem, size = 0x1000, scoped, tag = 'input window, operand 0, single buffered']
    #allocation3 [shape = 's32[1]{0}', space=sflag, size = 0x4, scoped, tag = 'scoped memory for tpu_custom_call.1']
    #allocation4 [shape = 's32[1]{0}', space=sflag, size = 0x4, scoped, tag = 'scoped memory for tpu_custom_call.1']
    #allocation5 [shape = 'u8[16384]{0}', space=vmem, size = 0x4000, scoped, tag = 'input window, operand 1, single buffered']
    #allocation6 [shape = 's32[1]{0}', space=sflag, size = 0x4, scoped, tag = 'scoped memory for tpu_custom_call.1']
    #allocation7 [shape = 'u8[16384]{0}', space=vmem, size = 0x4000, scoped, tag = 'input window, operand 2, single buffered']
    #allocation8 [shape = 'u8[4096]{0}', space=vmem, size = 0x1000, scoped, tag = 'output window, operand 0, single buffered']
    %10 = vsyncpa [#allocation3], 0
    %11 = vsyncpa [#allocation6], 0
    %12 = vsyncpa [#allocation4], 0
    // Predicated region
    $region2: #{tpu_custom_call.1} parent=1 // pred_check
      _
    $region3: #{tpu_custom_call.1} parent=1 // pred_check_branch
      %14 = sbr.rel (0) target = $region5
    $region4: #{tpu_custom_call.1} parent=1 // pred_region
      %s16 = ssub.s32 128, 128
      %17 = vsyncadd [#allocation3], %s16
      %s19 = sshll.u32 [#allocation2], 4
      %s20 = int_to_ptr.vmem [resolvable:$true] %s19
      %22 = dma.hbm_to_vmem [thread:$0]  %s0, 128, %s20, [#allocation3]
    $region5: #{tpu_custom_call.1} parent=1 // pred_fallthru
      _
    // Predicated region
    $region6: #{tpu_custom_call.1} parent=1 // pred_check
      _
    $region7: #{tpu_custom_call.1} parent=1 // pred_check_branch
      %24 = sbr.rel (0) target = $region9
    $region8: #{tpu_custom_call.1} parent=1 // pred_region
      %s26 = ssub.s32 512, 512
      %27 = vsyncadd [#allocation6], %s26
      %s28 = sshll.u32 [#allocation5], 4
      %s29 = int_to_ptr.vmem [resolvable:$true] %s28
      %34 = dma.hbm_to_vmem [thread:$0]  %s1, 512, %s29, [#allocation6], 64, 64, 4
    $region9: #{tpu_custom_call.1} parent=1 // pred_fallthru
      _
    // Predicated region
    $region10: #{tpu_custom_call.1} parent=1 // pred_check
      _
    $region11: #{tpu_custom_call.1} parent=1 // pred_check_branch
      %36 = sbr.rel (0) target = $region13
    $region12: #{tpu_custom_call.1} parent=1 // pred_region
      %s38 = ssub.s32 512, 512
      %39 = vsyncadd [#allocation6], %s38
      %s40 = sshll.u32 [#allocation7], 4
      %s41 = int_to_ptr.vmem [resolvable:$true] %s40
      %46 = dma.hbm_to_vmem [thread:$0]  %s2, 512, %s41, [#allocation6], 64, 64, 4
    $region13: #{tpu_custom_call.1} parent=1 // pred_fallthru
      _
    // Predicated region
    $region14: #{tpu_custom_call.1} parent=1 // pred_check
      _
    $region15: #{tpu_custom_call.1} parent=1 // pred_check_branch
      %48 = sbr.rel (0) target = $region17
    $region16: #{tpu_custom_call.1} parent=1 // pred_region
      _
    $region17: #{tpu_custom_call.1} parent=1 // pred_fallthru
      _
    // Predicated region
    $region18: #{tpu_custom_call.1} parent=1 // pred_check
      _
    $region19: #{tpu_custom_call.1} parent=1 // pred_check_branch
      %50 = sbr.rel (0) target = $region21
    $region20: #{tpu_custom_call.1} parent=1 // pred_region
      _
    $region21: #{tpu_custom_call.1} parent=1 // pred_fallthru
      _
    // Predicated region
    $region22: #{tpu_custom_call.1} parent=1 // pred_check
      _
    $region23: #{tpu_custom_call.1} parent=1 // pred_check_branch
      %52 = sbr.rel (0) target = $region25
    $region24: #{tpu_custom_call.1} parent=1 // pred_region
      %53 = dma.done [#allocation3], 128
    $region25: #{tpu_custom_call.1} parent=1 // pred_fallthru
      _
    // Predicated region
    $region26: #{tpu_custom_call.1} parent=1 // pred_check
      _
    $region27: #{tpu_custom_call.1} parent=1 // pred_check_branch
      %55 = sbr.rel (0) target = $region29
    $region28: #{tpu_custom_call.1} parent=1 // pred_region
      %56 = dma.done [#allocation6], 512
    $region29: #{tpu_custom_call.1} parent=1 // pred_fallthru
      _
    // Predicated region
    $region30: #{tpu_custom_call.1} parent=1 // pred_check
      _
    $region31: #{tpu_custom_call.1} parent=1 // pred_check_branch
      %58 = sbr.rel (0) target = $region33
    $region32: #{tpu_custom_call.1} parent=1 // pred_region
      %59 = dma.done [#allocation6], 512
    $region33: #{tpu_custom_call.1} parent=1 // pred_fallthru
      _
    %v61 = vld [vmem:[#allocation2] sm:$0xff]
    %v62 = vpack.c.bf16 %v61, %v61
    %v63 = vld [vmem:[#allocation5] sm:$0xf]
    %v64 = vld [vmem:[#allocation5 + $0x4] sm:$0xf]
    %v65 = vld [vmem:[#allocation5 + $0x8] sm:$0xf]
    %v66 = vld [vmem:[#allocation5 + $0xc] sm:$0xf]
    %v67 = vld [vmem:[#allocation5 + $0x10] sm:$0xf]
    %v68 = vld [vmem:[#allocation5 + $0x14] sm:$0xf]
    %v69 = vld [vmem:[#allocation5 + $0x18] sm:$0xf]
    %v70 = vld [vmem:[#allocation5 + $0x1c] sm:$0xf]
    %v71 = vld [vmem:[%s3] sm:$0x1]
    %v73 = vlaneseq
    %v74 = vshrl.u32 %v73, 7
    %v75 = vsub.s32 0, %v74
    %v76 = vrot.slane %v71, %v75
    %v86 = vunpack.c.l.b16 %v63
    %v87 = vunpack.c.l.b16 %v64
    %v88 = vunpack.c.l.b16 %v65
    %v89 = vunpack.c.l.b16 %v66
    %v90 = vunpack.c.l.b16 %v67
    %v91 = vunpack.c.l.b16 %v68
    %v92 = vunpack.c.l.b16 %v69
    %v93 = vunpack.c.l.b16 %v70
    %v94 = vpack.c.b16 %v87, %v86
    %v95 = vpack.c.b16 %v89, %v88
    %v96 = vpack.c.b16 %v91, %v90
    %v97 = vpack.c.b16 %v93, %v92
    %vm102 = vcmask 523264
    %v104 = vsel %vm102, %v62, 0
    %106 = vmatprep.subr.bf16.mxu0 0
    %107 = vmatpush1.bf16.msra.mxu0 0
    %108 = vmatprep.subr.bf16.mxu0 0
    %109 = vmatpush1.bf16.msra.mxu0 0
    %110 = vmatprep.subr.bf16.mxu0 0
    %111 = vmatpush1.bf16.msra.mxu0 0
    %112 = vmatprep.subr.bf16.mxu0 0
    %113 = vmatpush1.bf16.msra.mxu0 0
    %114 = vmatprep.subr.bf16.mxu0 0
    %115 = vmatpush1.bf16.msra.mxu0 %v97
    %116 = vmatprep.subr.bf16.mxu0 0
    %117 = vmatpush1.bf16.msra.mxu0 %v96
    %118 = vmatprep.subr.bf16.mxu0 0
    %119 = vmatpush1.bf16.msra.mxu0 %v95
    %120 = vmatprep.subr.bf16.mxu0 0
    %121 = vmatpush1.bf16.msra.mxu0 %v94
    %122 = vmatprep.subr.bf16.mxu0 0
    %123 = vmatpush2.bf16.msra.mxu0 0
    %124 = vmatprep.subr.bf16.mxu0 0
    %125 = vmatpush2.bf16.msra.mxu0 0
    %126 = vmatprep.subr.bf16.mxu0 0
    %127 = vmatpush2.bf16.msra.mxu0 0
    %128 = vmatprep.subr.bf16.mxu0 0
    %129 = vmatpush2.bf16.msra.mxu0 0
    %130 = vmatprep.subr.bf16.mxu0 0
    %131 = vmatpush2.bf16.msra.mxu0 0
    %132 = vmatprep.subr.bf16.mxu0 0
    %133 = vmatpush2.bf16.msra.mxu0 0
    %134 = vmatprep.subr.bf16.mxu0 0
    %135 = vmatpush2.bf16.msra.mxu0 0
    %136 = vmatprep.subr.bf16.mxu0 0
    %137 = vmatpush2.bf16.msra.mxu0 0
    %138 = vmatprep.mubr.bf16.mxu0 0
    %139 = vmatmul.mubr.bf16.gmra.mxu0 %v104
    %v140 = vpop.f32.mrf.mxu0
    %v141 = vadd.f32 %v76, %v140
    %v142 = vpop.f32.mrf.mxu0
    %v143 = vpop.f32.mrf.mxu0
    %v144 = vpop.f32.mrf.mxu0
    %145 = vdwg.mxu0
    %v146 = vmax.f32 %v141, 0.0
    %v147 = vld [vmem:[#allocation7] sm:$0xf]
    %v148 = vld [vmem:[#allocation7 + $0x4] sm:$0xf]
    %v149 = vld [vmem:[#allocation7 + $0x8] sm:$0xf]
    %v150 = vld [vmem:[#allocation7 + $0xc] sm:$0xf]
    %v151 = vld [vmem:[#allocation7 + $0x10] sm:$0xf]
    %v152 = vld [vmem:[#allocation7 + $0x14] sm:$0xf]
    %v153 = vld [vmem:[#allocation7 + $0x18] sm:$0xf]
    %v154 = vld [vmem:[#allocation7 + $0x1c] sm:$0xf]
    %v155 = vld [vmem:[%s4] sm:$0x1]
    %v157 = vlaneseq
    %v158 = vshrl.u32 %v157, 7
    %v159 = vsub.s32 0, %v158
    %v160 = vrot.slane %v155, %v159
    %v170 = vunpack.c.l.b16 %v147
    %v171 = vunpack.c.l.b16 %v148
    %v172 = vunpack.c.l.b16 %v149
    %v173 = vunpack.c.l.b16 %v150
    %v174 = vunpack.c.l.b16 %v151
    %v175 = vunpack.c.l.b16 %v152
    %v176 = vunpack.c.l.b16 %v153
    %v177 = vunpack.c.l.b16 %v154
    %v178 = vpack.c.b16 %v171, %v170
    %v179 = vpack.c.b16 %v173, %v172
    %v180 = vpack.c.b16 %v175, %v174
    %v181 = vpack.c.b16 %v177, %v176
    %186 = vmatprep.subr.bf16.mxu0 0
    %187 = vmatpush1.bf16.msra.mxu0 0
    %188 = vmatprep.subr.bf16.mxu0 0
    %189 = vmatpush1.bf16.msra.mxu0 0
    %190 = vmatprep.subr.bf16.mxu0 0
    %191 = vmatpush1.bf16.msra.mxu0 0
    %192 = vmatprep.subr.bf16.mxu0 0
    %193 = vmatpush1.bf16.msra.mxu0 0
    %194 = vmatprep.subr.bf16.mxu0 0
    %195 = vmatpush1.bf16.msra.mxu0 %v181
    %196 = vmatprep.subr.bf16.mxu0 0
    %197 = vmatpush1.bf16.msra.mxu0 %v180
    %198 = vmatprep.subr.bf16.mxu0 0
    %199 = vmatpush1.bf16.msra.mxu0 %v179
    %200 = vmatprep.subr.bf16.mxu0 0
    %201 = vmatpush1.bf16.msra.mxu0 %v178
    %202 = vmatprep.subr.bf16.mxu0 0
    %203 = vmatpush2.bf16.msra.mxu0 0
    %204 = vmatprep.subr.bf16.mxu0 0
    %205 = vmatpush2.bf16.msra.mxu0 0
    %206 = vmatprep.subr.bf16.mxu0 0
    %207 = vmatpush2.bf16.msra.mxu0 0
    %208 = vmatprep.subr.bf16.mxu0 0
    %209 = vmatpush2.bf16.msra.mxu0 0
    %210 = vmatprep.subr.bf16.mxu0 0
    %211 = vmatpush2.bf16.msra.mxu0 0
    %212 = vmatprep.subr.bf16.mxu0 0
    %213 = vmatpush2.bf16.msra.mxu0 0
    %214 = vmatprep.subr.bf16.mxu0 0
    %215 = vmatpush2.bf16.msra.mxu0 0
    %216 = vmatprep.subr.bf16.mxu0 0
    %217 = vmatpush2.bf16.msra.mxu0 0
    %218 = vmatprep.mubr.bf16.mxu0 0
    %219 = vmatmul.mubr.bf16.gmra.mxu0 %v104
    %v220 = vpop.f32.mrf.mxu0
    %v221 = vadd.f32 %v160, %v220
    %v222 = vpop.f32.mrf.mxu0
    %v223 = vpop.f32.mrf.mxu0
    %v224 = vpop.f32.mrf.mxu0
    %225 = vdwg.mxu0
    %v226 = vsub.f32 0.0, %v221
    %v227 = vmul.f32 %v226, 1.442695
    %v228 = vpow.pop %v227
    %v229 = vadd.f32 %v228, 1.0
    %v230 = vrcp.pop %v229
    %v231 = vsub.f32 %v146, %v61
    %v232 = vmul.f32 %v230, %v231
    %v233 = vadd.f32 %v61, %v232
    %234 = vst.msk [vmem:[#allocation8] sm:$0xff] %vm102, %v233
    // Predicated region
    $region34: #{tpu_custom_call.1} parent=1 // pred_check
      _
    $region35: #{tpu_custom_call.1} parent=1 // pred_check_branch
      %236 = sbr.rel (0) target = $region37
    $region36: #{tpu_custom_call.1} parent=1 // pred_region
      %s238 = ssub.s32 128, 128
      %239 = vsyncadd [#allocation4], %s238
      %s241 = sshll.u32 [#allocation8], 4
      %s242 = int_to_ptr.vmem [resolvable:$true] %s241
      %244 = dma.vmem_to_hbm [thread:$0]  %s242, 128, %s5, [#allocation4]
    $region37: #{tpu_custom_call.1} parent=1 // pred_fallthru
      _
    // Predicated region
    $region38: #{tpu_custom_call.1} parent=1 // pred_check
      _
    $region39: #{tpu_custom_call.1} parent=1 // pred_check_branch
      %246 = sbr.rel (0) target = $region41
    $region40: #{tpu_custom_call.1} parent=1 // pred_region
      %247 = dma.done [#allocation4], 128
    $region41: #{tpu_custom_call.1} parent=1 // pred_fallthru
      _
    %248 = vsyncpa [#allocation3], 1
    %249 = vsyncpa [#allocation6], 1
    %250 = vsyncpa [#allocation4], 1

// kernel: tpu_custom_call.1
$region0: #{tpu_custom_call.1}
  #allocation0 [shape = 'u32[]', space=smem, size = 0x4, offset = 0x4, fixed_abs, tag = 'smem constant byte address 0x4 - core index']
  #allocation1 [shape = 'u32[144,128]{1,0:T(1,128)}', space=vmem, size = 0x12000, scoped, tag = 'internal scratch']
  %s0 = inlined_call_operand.hbm [shape: f32[8,64], index: 0, kind: input, shape index: {}]
  %s1 = inlined_call_operand.hbm [shape: bf16[64,64], index: 1, kind: input, shape index: {}]
  %s2 = inlined_call_operand.hbm [shape: bf16[64,64], index: 2, kind: input, shape index: {}]
  %s3 = inlined_call_operand.vmem [shape: f32[1,64], index: 3, kind: input, shape index: {}]
  %s4 = inlined_call_operand.vmem [shape: f32[1,64], index: 4, kind: input, shape index: {}]
  %s5 = inlined_call_operand.hbm [shape: f32[8,64], index: 5, kind: output, shape index: {}]
  %s6 = sld [smem:[#allocation0]]
  $region42: #{tpu_custom_call.1} parent=0
    _
  %s8 = ssub.s32 1, %s6
  %s9 = scalar_select 0, %s8, %s6
  $region1: #{tpu_custom_call.1} parent=0
    #allocation2 [shape = 'u8[4096]{0}', space=vmem, size = 0x1000, scoped, tag = 'input window, operand 0, single buffered']
    #allocation3 [shape = 's32[1]{0}', space=sflag, size = 0x4, scoped, tag = 'scoped memory for tpu_custom_call.1']
    #allocation4 [shape = 's32[1]{0}', space=sflag, size = 0x4, scoped, tag = 'scoped memory for tpu_custom_call.1']
    #allocation5 [shape = 'u8[16384]{0}', space=vmem, size = 0x4000, scoped, tag = 'input window, operand 1, single buffered']
    #allocation6 [shape = 's32[1]{0}', space=sflag, size = 0x4, scoped, tag = 'scoped memory for tpu_custom_call.1']
    #allocation7 [shape = 'u8[16384]{0}', space=vmem, size = 0x4000, scoped, tag = 'input window, operand 2, single buffered']
    #allocation8 [shape = 'u8[4096]{0}', space=vmem, size = 0x1000, scoped, tag = 'output window, operand 0, single buffered']
    %10 = vsyncpa [#allocation3], 0
    %11 = vsyncpa [#allocation6], 0
    %12 = vsyncpa [#allocation4], 0
    // Predicated region
    $region2: #{tpu_custom_call.1} parent=1 // pred_check
      _
    $region3: #{tpu_custom_call.1} parent=1 // pred_check_branch
      %14 = sbr.rel (0) target = $region5
    $region4: #{tpu_custom_call.1} parent=1 // pred_region
      %s16 = ssub.s32 128, 128
      %17 = vsyncadd [#allocation3], %s16
      %s19 = sshll.u32 [#allocation2], 4
      %s20 = int_to_ptr.vmem [resolvable:$true] %s19
      %22 = dma.hbm_to_vmem [thread:$0]  %s0, 128, %s20, [#allocation3]
    $region5: #{tpu_custom_call.1} parent=1 // pred_fallthru
      _
    // Predicated region
    $region6: #{tpu_custom_call.1} parent=1 // pred_check
      _
    $region7: #{tpu_custom_call.1} parent=1 // pred_check_branch
      %24 = sbr.rel (0) target = $region9
    $region8: #{tpu_custom_call.1} parent=1 // pred_region
      %s26 = ssub.s32 512, 512
      %27 = vsyncadd [#allocation6], %s26
      %s28 = sshll.u32 [#allocation5], 4
      %s29 = int_to_ptr.vmem [resolvable:$true] %s28
      %34 = dma.hbm_to_vmem [thread:$0]  %s1, 512, %s29, [#allocation6], 64, 64, 4
    $region9: #{tpu_custom_call.1} parent=1 // pred_fallthru
      _
    // Predicated region
    $region10: #{tpu_custom_call.1} parent=1 // pred_check
      _
    $region11: #{tpu_custom_call.1} parent=1 // pred_check_branch
      %36 = sbr.rel (0) target = $region13
    $region12: #{tpu_custom_call.1} parent=1 // pred_region
      %s38 = ssub.s32 512, 512
      %39 = vsyncadd [#allocation6], %s38
      %s40 = sshll.u32 [#allocation7], 4
      %s41 = int_to_ptr.vmem [resolvable:$true] %s40
      %46 = dma.hbm_to_vmem [thread:$0]  %s2, 512, %s41, [#allocation6], 64, 64, 4
    $region13: #{tpu_custom_call.1} parent=1 // pred_fallthru
      _
    // Predicated region
    $region14: #{tpu_custom_call.1} parent=1 // pred_check
      _
    $region15: #{tpu_custom_call.1} parent=1 // pred_check_branch
      %48 = sbr.rel (0) target = $region17
    $region16: #{tpu_custom_call.1} parent=1 // pred_region
      _
    $region17: #{tpu_custom_call.1} parent=1 // pred_fallthru
      _
    // Predicated region
    $region18: #{tpu_custom_call.1} parent=1 // pred_check
      _
    $region19: #{tpu_custom_call.1} parent=1 // pred_check_branch
      %50 = sbr.rel (0) target = $region21
    $region20: #{tpu_custom_call.1} parent=1 // pred_region
      _
    $region21: #{tpu_custom_call.1} parent=1 // pred_fallthru
      _
    // Predicated region
    $region22: #{tpu_custom_call.1} parent=1 // pred_check
      _
    $region23: #{tpu_custom_call.1} parent=1 // pred_check_branch
      %52 = sbr.rel (0) target = $region25
    $region24: #{tpu_custom_call.1} parent=1 // pred_region
      %53 = dma.done [#allocation3], 128
    $region25: #{tpu_custom_call.1} parent=1 // pred_fallthru
      _
    // Predicated region
    $region26: #{tpu_custom_call.1} parent=1 // pred_check
      _
    $region27: #{tpu_custom_call.1} parent=1 // pred_check_branch
      %55 = sbr.rel (0) target = $region29
    $region28: #{tpu_custom_call.1} parent=1 // pred_region
      %56 = dma.done [#allocation6], 512
    $region29: #{tpu_custom_call.1} parent=1 // pred_fallthru
      _
    // Predicated region
    $region30: #{tpu_custom_call.1} parent=1 // pred_check
      _
    $region31: #{tpu_custom_call.1} parent=1 // pred_check_branch
      %58 = sbr.rel (0) target = $region33
    $region32: #{tpu_custom_call.1} parent=1 // pred_region
      %59 = dma.done [#allocation6], 512
    $region33: #{tpu_custom_call.1} parent=1 // pred_fallthru
      _
    %v61 = vld [vmem:[#allocation2] sm:$0xff]
    %v62 = vpack.c.bf16 %v61, %v61
    %v63 = vld [vmem:[#allocation5] sm:$0xf]
    %v64 = vld [vmem:[#allocation5 + $0x4] sm:$0xf]
    %v65 = vld [vmem:[#allocation5 + $0x8] sm:$0xf]
    %v66 = vld [vmem:[#allocation5 + $0xc] sm:$0xf]
    %v67 = vld [vmem:[#allocation5 + $0x10] sm:$0xf]
    %v68 = vld [vmem:[#allocation5 + $0x14] sm:$0xf]
    %v69 = vld [vmem:[#allocation5 + $0x18] sm:$0xf]
    %v70 = vld [vmem:[#allocation5 + $0x1c] sm:$0xf]
    %v71 = vld [vmem:[%s3] sm:$0x1]
    %v73 = vlaneseq
    %v74 = vshrl.u32 %v73, 7
    %v75 = vsub.s32 0, %v74
    %v76 = vrot.slane %v71, %v75
    %v86 = vunpack.c.l.b16 %v63
    %v87 = vunpack.c.l.b16 %v64
    %v88 = vunpack.c.l.b16 %v65
    %v89 = vunpack.c.l.b16 %v66
    %v90 = vunpack.c.l.b16 %v67
    %v91 = vunpack.c.l.b16 %v68
    %v92 = vunpack.c.l.b16 %v69
    %v93 = vunpack.c.l.b16 %v70
    %v94 = vpack.c.b16 %v87, %v86
    %v95 = vpack.c.b16 %v89, %v88
    %v96 = vpack.c.b16 %v91, %v90
    %v97 = vpack.c.b16 %v93, %v92
    %vm102 = vcmask 523264
    %v104 = vsel %vm102, %v62, 0
    %106 = vmatprep.subr.bf16.mxu0 0
    %107 = vmatpush1.bf16.msra.mxu0 0
    %108 = vmatprep.subr.bf16.mxu0 0
    %109 = vmatpush1.bf16.msra.mxu0 0
    %110 = vmatprep.subr.bf16.mxu0 0
    %111 = vmatpush1.bf16.msra.mxu0 0
    %112 = vmatprep.subr.bf16.mxu0 0
    %113 = vmatpush1.bf16.msra.mxu0 0
    %114 = vmatprep.subr.bf16.mxu0 0
    %115 = vmatpush1.bf16.msra.mxu0 %v97
    %116 = vmatprep.subr.bf16.mxu0 0
    %117 = vmatpush1.bf16.msra.mxu0 %v96
    %118 = vmatprep.subr.bf16.mxu0 0
    %119 = vmatpush1.bf16.msra.mxu0 %v95
    %120 = vmatprep.subr.bf16.mxu0 0
    %121 = vmatpush1.bf16.msra.mxu0 %v94
    %122 = vmatprep.subr.bf16.mxu0 0
    %123 = vmatpush2.bf16.msra.mxu0 0
    %124 = vmatprep.subr.bf16.mxu0 0
    %125 = vmatpush2.bf16.msra.mxu0 0
    %126 = vmatprep.subr.bf16.mxu0 0
    %127 = vmatpush2.bf16.msra.mxu0 0
    %128 = vmatprep.subr.bf16.mxu0 0
    %129 = vmatpush2.bf16.msra.mxu0 0
    %130 = vmatprep.subr.bf16.mxu0 0
    %131 = vmatpush2.bf16.msra.mxu0 0
    %132 = vmatprep.subr.bf16.mxu0 0
    %133 = vmatpush2.bf16.msra.mxu0 0
    %134 = vmatprep.subr.bf16.mxu0 0
    %135 = vmatpush2.bf16.msra.mxu0 0
    %136 = vmatprep.subr.bf16.mxu0 0
    %137 = vmatpush2.bf16.msra.mxu0 0
    %138 = vmatprep.mubr.bf16.mxu0 0
    %139 = vmatmul.mubr.bf16.gmra.mxu0 %v104
    %v140 = vpop.f32.mrf.mxu0
    %v141 = vadd.f32 %v76, %v140
    %v142 = vpop.f32.mrf.mxu0
    %v143 = vpop.f32.mrf.mxu0
    %v144 = vpop.f32.mrf.mxu0
    %145 = vdwg.mxu0
    %v146 = vmax.f32 %v141, 0.0
    %v147 = vld [vmem:[#allocation7] sm:$0xf]
    %v148 = vld [vmem:[#allocation7 + $0x4] sm:$0xf]
    %v149 = vld [vmem:[#allocation7 + $0x8] sm:$0xf]
    %v150 = vld [vmem:[#allocation7 + $0xc] sm:$0xf]
    %v151 = vld [vmem:[#allocation7 + $0x10] sm:$0xf]
    %v152 = vld [vmem:[#allocation7 + $0x14] sm:$0xf]
    %v153 = vld [vmem:[#allocation7 + $0x18] sm:$0xf]
    %v154 = vld [vmem:[#allocation7 + $0x1c] sm:$0xf]
    %v155 = vld [vmem:[%s4] sm:$0x1]
    %v157 = vlaneseq
    %v158 = vshrl.u32 %v157, 7
    %v159 = vsub.s32 0, %v158
    %v160 = vrot.slane %v155, %v159
    %v170 = vunpack.c.l.b16 %v147
    %v171 = vunpack.c.l.b16 %v148
    %v172 = vunpack.c.l.b16 %v149
    %v173 = vunpack.c.l.b16 %v150
    %v174 = vunpack.c.l.b16 %v151
    %v175 = vunpack.c.l.b16 %v152
    %v176 = vunpack.c.l.b16 %v153
    %v177 = vunpack.c.l.b16 %v154
    %v178 = vpack.c.b16 %v171, %v170
    %v179 = vpack.c.b16 %v173, %v172
    %v180 = vpack.c.b16 %v175, %v174
    %v181 = vpack.c.b16 %v177, %v176
    %186 = vmatprep.subr.bf16.mxu0 0
    %187 = vmatpush1.bf16.msra.mxu0 0
    %188 = vmatprep.subr.bf16.mxu0 0
    %189 = vmatpush1.bf16.msra.mxu0 0
    %190 = vmatprep.subr.bf16.mxu0 0
    %191 = vmatpush1.bf16.msra.mxu0 0
    %192 = vmatprep.subr.bf16.mxu0 0
    %193 = vmatpush1.bf16.msra.mxu0 0
    %194 = vmatprep.subr.bf16.mxu0 0
    %195 = vmatpush1.bf16.msra.mxu0 %v181
    %196 = vmatprep.subr.bf16.mxu0 0
    %197 = vmatpush1.bf16.msra.mxu0 %v180
    %198 = vmatprep.subr.bf16.mxu0 0
    %199 = vmatpush1.bf16.msra.mxu0 %v179
    %200 = vmatprep.subr.bf16.mxu0 0
    %201 = vmatpush1.bf16.msra.mxu0 %v178
    %202 = vmatprep.subr.bf16.mxu0 0
    %203 = vmatpush2.bf16.msra.mxu0 0
    %204 = vmatprep.subr.bf16.mxu0 0
    %205 = vmatpush2.bf16.msra.mxu0 0
    %206 = vmatprep.subr.bf16.mxu0 0
    %207 = vmatpush2.bf16.msra.mxu0 0
    %208 = vmatprep.subr.bf16.mxu0 0
    %209 = vmatpush2.bf16.msra.mxu0 0
    %210 = vmatprep.subr.bf16.mxu0 0
    %211 = vmatpush2.bf16.msra.mxu0 0
    %212 = vmatprep.subr.bf16.mxu0 0
    %213 = vmatpush2.bf16.msra.mxu0 0
    %214 = vmatprep.subr.bf16.mxu0 0
    %215 = vmatpush2.bf16.msra.mxu0 0
    %216 = vmatprep.subr.bf16.mxu0 0
    %217 = vmatpush2.bf16.msra.mxu0 0
    %218 = vmatprep.mubr.bf16.mxu0 0
    %219 = vmatmul.mubr.bf16.gmra.mxu0 %v104
    %v220 = vpop.f32.mrf.mxu0
    %v221 = vadd.f32 %v160, %v220
    %v222 = vpop.f32.mrf.mxu0
    %v223 = vpop.f32.mrf.mxu0
    %v224 = vpop.f32.mrf.mxu0
    %225 = vdwg.mxu0
    %v226 = vsub.f32 0.0, %v221
    %v227 = vmul.f32 %v226, 1.442695
    %v228 = vpow.pop %v227
    %v229 = vadd.f32 %v228, 1.0
    %v230 = vrcp.pop %v229
    %v231 = vsub.f32 %v146, %v61
    %v232 = vmul.f32 %v230, %v231
    %v233 = vadd.f32 %v61, %v232
    %234 = vst.msk [vmem:[#allocation8] sm:$0xff] %vm102, %v233
    // Predicated region
    $region34: #{tpu_custom_call.1} parent=1 // pred_check
      _
    $region35: #{tpu_custom_call.1} parent=1 // pred_check_branch
      %236 = sbr.rel (0) target = $region37
    $region36: #{tpu_custom_call.1} parent=1 // pred_region
      %s238 = ssub.s32 128, 128
      %239 = vsyncadd [#allocation4], %s238
      %s241 = sshll.u32 [#allocation8], 4
      %s242 = int_to_ptr.vmem [resolvable:$true] %s241
      %244 = dma.vmem_to_hbm [thread:$0]  %s242, 128, %s5, [#allocation4]
    $region37: #{tpu_custom_call.1} parent=1 // pred_fallthru
      _
    // Predicated region
    $region38: #{tpu_custom_call.1} parent=1 // pred_check
      _
    $region39: #{tpu_custom_call.1} parent=1 // pred_check_branch
      %246 = sbr.rel (0) target = $region41
    $region40: #{tpu_custom_call.1} parent=1 // pred_region
      %247 = dma.done [#allocation4], 128
    $region41: #{tpu_custom_call.1} parent=1 // pred_fallthru
      _
    %248 = vsyncpa [#allocation3], 1
    %249 = vsyncpa [#allocation6], 1
    %250 = vsyncpa [#allocation4], 1

</llo_original>
